<compile_context>
chip_gen: v6e
topology: v6e:2x2x1
jax: 0.10.0
libtpu: 0.0.40
codegen_flags: <defaults>
</compile_context>

<pallas_src>
import functools

import jax
import jax.numpy as jnp
from jax import lax
from jax.experimental import pallas as pl
from jax.experimental.pallas import tpu as pltpu


def _round_up(n, m):
    return ((n + m - 1) // m) * m


def _tile_vmem_bytes(rows, cols, dtype):
    """VMEM footprint of a [rows, cols] value ((sublane,128)-tiled, lane-padded)."""
    item = jnp.dtype(dtype).itemsize
    sublane = 8 * (4 // item)              # 8 for f32, 16 for bf16
    return _round_up(max(rows, 1), sublane) * _round_up(max(cols, 1), 128) * item


def _vmem_need_bytes(block_b, enc_dim, info_dim, feat_dims, in_dtype):
    """Generous upper bound on the kernel's VMEM footprint for one batch tile."""
    f32 = jnp.float32
    # Double-buffered streamed tiles (narrow feature dims are lane-padded to 128).
    need = 2 * (_tile_vmem_bytes(block_b, enc_dim, in_dtype)
                + _tile_vmem_bytes(block_b, info_dim, in_dtype)
                + _tile_vmem_bytes(feat_dims[-1], block_b, f32))
    # In-kernel live values: f32 views of the inputs + feature-major activations.
    acts = (_tile_vmem_bytes(block_b, enc_dim, f32)
            + _tile_vmem_bytes(block_b, info_dim, f32))
    for d in feat_dims:
        acts += _tile_vmem_bytes(d, block_b, f32)
    return need + 2 * acts + (1 << 20)     # 2x margin for compiler temps + weights


def satisfied_kernel(enc_ref, info_ref,
                     w_sym_ref, b_sym_ref,
                     w_h1a_ref, w_h1b_ref, b_h1_ref,
                     w_h2_ref, b_h2_ref,
                     w_out_ref, b_out_ref,
                     out_ref):
    f32 = jnp.float32
    # Streamed tiles arrive in the caller's dtype (f32, or bf16 on the
    # bandwidth-optimized path); the in-register upcast is exact and keeps the
    # transposed-RHS matmuls on the well-supported 32-bit path.
    x_enc = enc_ref[...].astype(f32)       # [block_b, enc_dim]
    x_info = info_ref[...].astype(f32)     # [block_b, info_dim]

    # Contract the feature axis of the batch-major tiles directly (trans-B dot)
    # so every intermediate is feature-major: batch stays on the 128-lane axis.
    dn = (((1,), (1,)), ((), ()))

    # Symbol encoder: ReLU(W_sym @ sat_info^T + b_sym)        -> [sym_enc, block_b]
    sym = lax.dot_general(w_sym_ref[...], x_info, dn, preferred_element_type=f32)
    sym = jnp.maximum(sym + b_sym_ref[...], 0.0)

    # Hidden layer 1 on concat([sat_enc, sym_enc]) as two accumulating dots
    # (no concat / relayout of the big tiles).                -> [h1, block_b]
    h = lax.dot_general(w_h1a_ref[...], x_enc, dn, preferred_element_type=f32)
    h = h + jnp.dot(w_h1b_ref[...], sym, preferred_element_type=f32)
    h = jnp.maximum(h + b_h1_ref[...], 0.0)

    # Hidden layer 2.                                         -> [h2, block_b]
    h = jnp.dot(w_h2_ref[...], h, preferred_element_type=f32)
    h = jnp.maximum(h + b_h2_ref[...], 0.0)

    # Output layer (no activation); [2, block_b] lane-dense full-width stores.
    o = jnp.dot(w_out_ref[...], h, preferred_element_type=f32)
    out_ref[...] = (o + b_out_ref[...]).astype(out_ref.dtype)


def satisfied_net(sat_enc, sat_info, params, *, block_b=8192):
    """Pallas forward pass.

    sat_enc:  [B, feat_size*2]   (f32; pass bf16 to halve streamed HBM traffic)
    sat_info: [B, symbol_size*2] (same dtype as sat_enc)
    params:   torch-layout Linear weights [out, in] and biases [out, 1]
    returns:  [B, 2] f32 logits
    """
    B, enc_dim = sat_enc.shape
    info_dim = sat_info.shape[1]
    f32 = jnp.float32

    sym_enc = params["w_sym"].shape[0]
    h1 = params["w_h1"].shape[0]
    h2 = params["w_h2"].shape[0]
    out_dim = params["w_out"].shape[0]
    assert params["w_h1"].shape[1] == enc_dim + sym_enc
    assert params["w_sym"].shape[1] == info_dim

    # --- batch tile sizing: batch sits on the 128-lane axis of all intermediates.
    block_b = max(128, _round_up(block_b, 128))
    block_b = min(block_b, _round_up(B, 128))
    feat_dims = (sym_enc, h1, h2, out_dim)
    vmem_budget = 44 << 20                 # conservative; headroom on v7x (64 MiB/TC)
    while block_b > 128 and _vmem_need_bytes(
            block_b, enc_dim, info_dim, feat_dims, sat_enc.dtype) > vmem_budget:
        block_b = max(128, _round_up(block_b // 2, 128))
    need = _vmem_need_bytes(block_b, enc_dim, info_dim, feat_dims, sat_enc.dtype)
    # Default scoped VMEM (16/32 MiB) is too small for big batch tiles; request
    # more only when needed and stay well under v7x's 64 MiB per TensorCore.
    vmem_limit = (48 << 20) if need > (14 << 20) else None

    grid = (pl.cdiv(B, block_b),)          # ragged last block handled by Pallas

    # --- weights: tiny, f32-resident; W_h1 split at trace time into its
    #     sat_enc / sym_enc column blocks (replaces the in-kernel concat).
    w_sym = params["w_sym"].astype(f32)
    w_h1 = params["w_h1"].astype(f32)
    w_h1a, w_h1b = w_h1[:, :enc_dim], w_h1[:, enc_dim:]
    w_h2 = params["w_h2"].astype(f32)
    w_out = params["w_out"].astype(f32)
    b_sym = params["b_sym"].astype(f32)
    b_h1 = params["b_h1"].astype(f32)
    b_h2 = params["b_h2"].astype(f32)
    b_out = params["b_out"].astype(f32)

    def full(a):  # whole-array block, constant index => fetched once, stays resident
        return pl.BlockSpec(a.shape, lambda i: (0, 0))

    grid_spec = pltpu.PrefetchScalarGridSpec(
        num_scalar_prefetch=0,
        grid=grid,
        in_specs=[
            pl.BlockSpec((block_b, enc_dim), lambda i: (i, 0)),
            pl.BlockSpec((block_b, info_dim), lambda i: (i, 0)),
            full(w_sym), full(b_sym),
            full(w_h1a), full(w_h1b), full(b_h1),
            full(w_h2), full(b_h2),
            full(w_out), full(b_out),
        ],
        out_specs=pl.BlockSpec((out_dim, block_b), lambda i: (0, i)),
    )

    out = pl.pallas_call(
        satisfied_kernel,
        out_shape=jax.ShapeDtypeStruct((out_dim, B), jnp.float32),
        grid_spec=grid_spec,
        compiler_params=pltpu.CompilerParams(
            dimension_semantics=("parallel",),
            vmem_limit_bytes=vmem_limit),
    )(sat_enc, sat_info, w_sym, b_sym, w_h1a, w_h1b, b_h1, w_h2, b_h2, w_out, b_out)

    return out.T                                               # [B, 2]


def init_params(key, feat_size, symbol_size, hidden_dims, symbol_enc_size=32):
    """Torch-layout params: Linear weights [out, in], biases [out, 1]."""
    sym_in = symbol_size * 2
    sat_in = feat_size * 2 + symbol_enc_size
    h1, h2 = hidden_dims
    ks = jax.random.split(key, 8)

    def w(k, fan_out, fan_in):
        return jax.random.normal(k, (fan_out, fan_in), jnp.float32) / jnp.sqrt(fan_in)

    def b(k, fan_out):
        return jax.random.normal(k, (fan_out, 1), jnp.float32) * 0.01

    return {
        "w_sym": w(ks[0], symbol_enc_size, sym_in), "b_sym": b(ks[1], symbol_enc_size),
        "w_h1": w(ks[2], h1, sat_in),               "b_h1": b(ks[3], h1),
        "w_h2": w(ks[4], h2, h1),                   "b_h2": b(ks[5], h2),
        "w_out": w(ks[6], 2, h2),                   "b_out": b(ks[7], 2),
    }


def satisfied_net_ref(sat_enc, sat_info, params):
    """Pure-JAX f32 reference of the module (precision='highest')."""
    f32 = jnp.float32
    dot = functools.partial(jnp.dot, preferred_element_type=f32, precision="highest")
    p = {k: v.astype(f32) for k, v in params.items()}
    se = sat_enc.T.astype(f32)
    si = sat_info.T.astype(f32)
    sym = jnp.maximum(dot(p["w_sym"], si) + p["b_sym"], 0.0)
    xin = jnp.concatenate([se, sym], axis=0)
    h = jnp.maximum(dot(p["w_h1"], xin) + p["b_h1"], 0.0)
    h = jnp.maximum(dot(p["w_h2"], h) + p["b_h2"], 0.0)
    return (dot(p["w_out"], h) + p["b_out"]).T


if __name__ == "__main__":
    # Small, forward-consistent shapes.
    feat_size = 16          # sat_enc:  [B, 32]
    symbol_size = 8         # sat_info: [B, 16]
    symbol_enc_size = 32
    hidden_dims = (32, 32)
    batch = 200             # ragged on purpose: exercises the partial boundary block

    key = jax.random.PRNGKey(0)
    k_enc, k_info, k_param = jax.random.split(key, 3)
    sat_enc = jax.random.normal(k_enc, (batch, feat_size * 2), jnp.float32)
    sat_info = jax.random.normal(k_info, (batch, symbol_size * 2), jnp.float32)
    params = init_params(k_param, feat_size, symbol_size, hidden_dims, symbol_enc_size)

    def bf16_round(t):
        return t.astype(jnp.bfloat16).astype(jnp.float32)

    # 1) Tight structural check: bf16-valued f32 data makes every MXU product
    #    exact regardless of the f32 matmul precision mode, so the kernel must
    #    match the "highest"-precision XLA reference to rounding noise.
    #    block_b=128 forces a 2-step grid (exercises pipelining + ragged block).
    enc_q, info_q = bf16_round(sat_enc), bf16_round(sat_info)
    params_q = {k: bf16_round(v) for k, v in params.items()}
    out_q = jax.block_until_ready(
        satisfied_net(enc_q, info_q, params_q, block_b=128))
    ref_q = satisfied_net_ref(enc_q, info_q, params_q)
    assert out_q.shape == (batch, 2)
    assert jnp.allclose(out_q, ref_q, atol=1e-3, rtol=1e-3), "structural mismatch"

    # 2) Full-f32 module data at default tiling; loose bound only absorbs MXU
    #    f32 precision-mode differences vs XLA "highest".
    out_f32 = jax.block_until_ready(satisfied_net(sat_enc, sat_info, params))
    ref_f32 = satisfied_net_ref(sat_enc, sat_info, params)
    assert out_f32.shape == (batch, 2)
    assert jnp.allclose(out_f32, ref_f32, atol=5e-2, rtol=5e-2), "f32 path mismatch"

    # 3) Bandwidth-optimized path: caller streams bf16 inputs (halves the
    #    dominant HBM traffic); products stay exact vs the bf16-rounded reference.
    out_bf = jax.block_until_ready(
        satisfied_net(sat_enc.astype(jnp.bfloat16),
                      sat_info.astype(jnp.bfloat16), params_q))
    assert out_bf.shape == (batch, 2)
    assert jnp.allclose(out_bf, ref_q, atol=1e-3, rtol=1e-3), "bf16 input path mismatch"

    print("KERNEL_OK")
</pallas_src>

<mosaic_0001>
module attributes {stable_mosaic.version = 11 : i64} {
  func.func @satisfied_kernel(%arg0: i32, %arg1: memref<128x32xf32, #tpu.memory_space<vmem>>, %arg2: memref<128x16xf32, #tpu.memory_space<vmem>>, %arg3: memref<32x16xf32, #tpu.memory_space<vmem>>, %arg4: memref<32x1xf32, #tpu.memory_space<vmem>>, %arg5: memref<32x32xf32, #tpu.memory_space<vmem>>, %arg6: memref<32x32xf32, #tpu.memory_space<vmem>>, %arg7: memref<32x1xf32, #tpu.memory_space<vmem>>, %arg8: memref<32x32xf32, #tpu.memory_space<vmem>>, %arg9: memref<32x1xf32, #tpu.memory_space<vmem>>, %arg10: memref<2x32xf32, #tpu.memory_space<vmem>>, %arg11: memref<2x1xf32, #tpu.memory_space<vmem>>, %arg12: memref<2x128xf32, #tpu.memory_space<vmem>>) attributes {dimension_semantics = [#tpu.dimension_semantics<parallel>], iteration_bounds = array<i64: 2>, scalar_prefetch = 0 : i64, scratch_operands = 0 : i64, tpu.core_type = #tpu.core_type<tc>, window_params = [{transform_indices = @transform_0, window_bounds = array<i64: 128, 32>}, {transform_indices = @transform_1, window_bounds = array<i64: 128, 16>}, {pipeline_mode = #tpu.pipeline_mode<synchronous>, transform_indices = @transform_2, window_bounds = array<i64: 32, 16>}, {pipeline_mode = #tpu.pipeline_mode<synchronous>, transform_indices = @transform_3, window_bounds = array<i64: 32, 1>}, {pipeline_mode = #tpu.pipeline_mode<synchronous>, transform_indices = @transform_4, window_bounds = array<i64: 32, 32>}, {pipeline_mode = #tpu.pipeline_mode<synchronous>, transform_indices = @transform_5, window_bounds = array<i64: 32, 32>}, {pipeline_mode = #tpu.pipeline_mode<synchronous>, transform_indices = @transform_6, window_bounds = array<i64: 32, 1>}, {pipeline_mode = #tpu.pipeline_mode<synchronous>, transform_indices = @transform_7, window_bounds = array<i64: 32, 32>}, {pipeline_mode = #tpu.pipeline_mode<synchronous>, transform_indices = @transform_8, window_bounds = array<i64: 32, 1>}, {pipeline_mode = #tpu.pipeline_mode<synchronous>, transform_indices = @transform_9, window_bounds = array<i64: 2, 32>}, {pipeline_mode = #tpu.pipeline_mode<synchronous>, transform_indices = @transform_10, window_bounds = array<i64: 2, 1>}, {transform_indices = @transform_11, window_bounds = array<i64: 2, 128>}]} {
    %c0 = arith.constant 0 : index
    %c0_0 = arith.constant 0 : index
    %0 = vector.load %arg1[%c0, %c0_0] : memref<128x32xf32, #tpu.memory_space<vmem>>, vector<128x32xf32>
    %c0_1 = arith.constant 0 : index
    %c0_2 = arith.constant 0 : index
    %1 = vector.load %arg2[%c0_1, %c0_2] : memref<128x16xf32, #tpu.memory_space<vmem>>, vector<128x16xf32>
    %c0_3 = arith.constant 0 : index
    %c0_4 = arith.constant 0 : index
    %2 = vector.load %arg3[%c0_3, %c0_4] : memref<32x16xf32, #tpu.memory_space<vmem>>, vector<32x16xf32>
    %cst = arith.constant dense<0.000000e+00> : vector<32x128xf32>
    %3 = tpu.matmul %2, %1, %cst {dimension_numbers = #tpu.dot_dimension_numbers<[1], [1], [0], [0], [0, 0, 1, 0], [], []>} : vector<32x16xf32>, vector<128x16xf32>, vector<32x128xf32> -> vector<32x128xf32>
    %c0_5 = arith.constant 0 : index
    %c0_6 = arith.constant 0 : index
    %4 = vector.load %arg4[%c0_5, %c0_6] : memref<32x1xf32, #tpu.memory_space<vmem>>, vector<32x1xf32>
    %5 = vector.broadcast %4 : vector<32x1xf32> to vector<32x128xf32>
    %6 = arith.addf %3, %5 : vector<32x128xf32>
    %cst_7 = arith.constant 0.000000e+00 : f32
    %7 = vector.broadcast %cst_7 : f32 to vector<32x128xf32>
    %8 = arith.maximumf %6, %7 : vector<32x128xf32>
    %c0_8 = arith.constant 0 : index
    %c0_9 = arith.constant 0 : index
    %9 = vector.load %arg5[%c0_8, %c0_9] : memref<32x32xf32, #tpu.memory_space<vmem>>, vector<32x32xf32>
    %cst_10 = arith.constant dense<0.000000e+00> : vector<32x128xf32>
    %10 = tpu.matmul %9, %0, %cst_10 {dimension_numbers = #tpu.dot_dimension_numbers<[1], [1], [0], [0], [0, 0, 1, 0], [], []>} : vector<32x32xf32>, vector<128x32xf32>, vector<32x128xf32> -> vector<32x128xf32>
    %c0_11 = arith.constant 0 : index
    %c0_12 = arith.constant 0 : index
    %11 = vector.load %arg6[%c0_11, %c0_12] : memref<32x32xf32, #tpu.memory_space<vmem>>, vector<32x32xf32>
    %cst_13 = arith.constant dense<0.000000e+00> : vector<32x128xf32>
    %12 = tpu.matmul %11, %8, %cst_13 {dimension_numbers = #tpu.dot_dimension_numbers<[1], [0], [0], [1], [0, 0, 1, 1], [], []>} : vector<32x32xf32>, vector<32x128xf32>, vector<32x128xf32> -> vector<32x128xf32>
    %13 = arith.addf %10, %12 : vector<32x128xf32>
    %c0_14 = arith.constant 0 : index
    %c0_15 = arith.constant 0 : index
    %14 = vector.load %arg7[%c0_14, %c0_15] : memref<32x1xf32, #tpu.memory_space<vmem>>, vector<32x1xf32>
    %15 = vector.broadcast %14 : vector<32x1xf32> to vector<32x128xf32>
    %16 = arith.addf %13, %15 : vector<32x128xf32>
    %cst_16 = arith.constant 0.000000e+00 : f32
    %17 = vector.broadcast %cst_16 : f32 to vector<32x128xf32>
    %18 = arith.maximumf %16, %17 : vector<32x128xf32>
    %c0_17 = arith.constant 0 : index
    %c0_18 = arith.constant 0 : index
    %19 = vector.load %arg8[%c0_17, %c0_18] : memref<32x32xf32, #tpu.memory_space<vmem>>, vector<32x32xf32>
    %cst_19 = arith.constant dense<0.000000e+00> : vector<32x128xf32>
    %20 = tpu.matmul %19, %18, %cst_19 {dimension_numbers = #tpu.dot_dimension_numbers<[1], [0], [0], [1], [0, 0, 1, 1], [], []>} : vector<32x32xf32>, vector<32x128xf32>, vector<32x128xf32> -> vector<32x128xf32>
    %c0_20 = arith.constant 0 : index
    %c0_21 = arith.constant 0 : index
    %21 = vector.load %arg9[%c0_20, %c0_21] : memref<32x1xf32, #tpu.memory_space<vmem>>, vector<32x1xf32>
    %22 = vector.broadcast %21 : vector<32x1xf32> to vector<32x128xf32>
    %23 = arith.addf %20, %22 : vector<32x128xf32>
    %cst_22 = arith.constant 0.000000e+00 : f32
    %24 = vector.broadcast %cst_22 : f32 to vector<32x128xf32>
    %25 = arith.maximumf %23, %24 : vector<32x128xf32>
    %c0_23 = arith.constant 0 : index
    %c0_24 = arith.constant 0 : index
    %26 = vector.load %arg10[%c0_23, %c0_24] : memref<2x32xf32, #tpu.memory_space<vmem>>, vector<2x32xf32>
    %cst_25 = arith.constant dense<0.000000e+00> : vector<2x128xf32>
    %27 = tpu.matmul %26, %25, %cst_25 {dimension_numbers = #tpu.dot_dimension_numbers<[1], [0], [0], [1], [0, 0, 1, 1], [], []>} : vector<2x32xf32>, vector<32x128xf32>, vector<2x128xf32> -> vector<2x128xf32>
    %c0_26 = arith.constant 0 : index
    %c0_27 = arith.constant 0 : index
    %28 = vector.load %arg11[%c0_26, %c0_27] : memref<2x1xf32, #tpu.memory_space<vmem>>, vector<2x1xf32>
    %29 = vector.broadcast %28 : vector<2x1xf32> to vector<2x128xf32>
    %30 = arith.addf %27, %29 : vector<2x128xf32>
    %c0_28 = arith.constant 0 : index
    %c0_29 = arith.constant 0 : index
    %31 = vector.load %arg12[%c0_28, %c0_29] : memref<2x128xf32, #tpu.memory_space<vmem>>, vector<2x128xf32>
    tpu.vector_store %arg12[%c0_28, %c0_29], %30 {strides = array<i32>} : memref<2x128xf32, #tpu.memory_space<vmem>>, vector<2x128xf32>,
    return
  }
  func.func @transform_0(%arg0: i32) -> (i32, i32) {
    %c0_i32 = arith.constant 0 : i32
    %c0_i32_0 = arith.constant 0 : i32
    return %arg0, %c0_i32 : i32, i32
  }
  func.func @transform_1(%arg0: i32) -> (i32, i32) {
    %c0_i32 = arith.constant 0 : i32
    %c0_i32_0 = arith.constant 0 : i32
    return %arg0, %c0_i32 : i32, i32
  }
  func.func @transform_2(%arg0: i32) -> (i32, i32) {
    %c0_i32 = arith.constant 0 : i32
    %c0_i32_0 = arith.constant 0 : i32
    %c0_i32_1 = arith.constant 0 : i32
    return %c0_i32, %c0_i32_0 : i32, i32
  }
  func.func @transform_3(%arg0: i32) -> (i32, i32) {
    %c0_i32 = arith.constant 0 : i32
    %c0_i32_0 = arith.constant 0 : i32
    %c0_i32_1 = arith.constant 0 : i32
    return %c0_i32, %c0_i32_0 : i32, i32
  }
  func.func @transform_4(%arg0: i32) -> (i32, i32) {
    %c0_i32 = arith.constant 0 : i32
    %c0_i32_0 = arith.constant 0 : i32
    %c0_i32_1 = arith.constant 0 : i32
    return %c0_i32, %c0_i32_0 : i32, i32
  }
  func.func @transform_5(%arg0: i32) -> (i32, i32) {
    %c0_i32 = arith.constant 0 : i32
    %c0_i32_0 = arith.constant 0 : i32
    %c0_i32_1 = arith.constant 0 : i32
    return %c0_i32, %c0_i32_0 : i32, i32
  }
  func.func @transform_6(%arg0: i32) -> (i32, i32) {
    %c0_i32 = arith.constant 0 : i32
    %c0_i32_0 = arith.constant 0 : i32
    %c0_i32_1 = arith.constant 0 : i32
    return %c0_i32, %c0_i32_0 : i32, i32
  }
  func.func @transform_7(%arg0: i32) -> (i32, i32) {
    %c0_i32 = arith.constant 0 : i32
    %c0_i32_0 = arith.constant 0 : i32
    %c0_i32_1 = arith.constant 0 : i32
    return %c0_i32, %c0_i32_0 : i32, i32
  }
  func.func @transform_8(%arg0: i32) -> (i32, i32) {
    %c0_i32 = arith.constant 0 : i32
    %c0_i32_0 = arith.constant 0 : i32
    %c0_i32_1 = arith.constant 0 : i32
    return %c0_i32, %c0_i32_0 : i32, i32
  }
  func.func @transform_9(%arg0: i32) -> (i32, i32) {
    %c0_i32 = arith.constant 0 : i32
    %c0_i32_0 = arith.constant 0 : i32
    %c0_i32_1 = arith.constant 0 : i32
    return %c0_i32, %c0_i32_0 : i32, i32
  }
  func.func @transform_10(%arg0: i32) -> (i32, i32) {
    %c0_i32 = arith.constant 0 : i32
    %c0_i32_0 = arith.constant 0 : i32
    %c0_i32_1 = arith.constant 0 : i32
    return %c0_i32, %c0_i32_0 : i32, i32
  }
  func.func @transform_11(%arg0: i32) -> (i32, i32) {
    %c0_i32 = arith.constant 0 : i32
    %c0_i32_0 = arith.constant 0 : i32
    return %c0_i32, %arg0 : i32, i32
  }
}

</mosaic_0001>

<llo_original>
// kernel: tpu_custom_call.1
$region0: #{tpu_custom_call.1}
  #allocation0 [shape = 'u32[]', space=smem, size = 0x4, offset = 0x4, fixed_abs, tag = 'smem constant byte address 0x4 - core index']
  #allocation1 [shape = 'u32[144,128]{1,0:T(1,128)}', space=vmem, size = 0x12000, scoped, tag = 'internal scratch']
  %s0 = inlined_call_operand.vmem [shape: f32[200,32], index: 0, kind: input, shape index: {}]
  %s1 = inlined_call_operand.vmem [shape: f32[200,16], index: 1, kind: input, shape index: {}]
  %s2 = inlined_call_operand.vmem [shape: f32[32,16], index: 2, kind: input, shape index: {}]
  %s3 = inlined_call_operand.vmem [shape: f32[32,1], index: 3, kind: input, shape index: {}]
  %s4 = inlined_call_operand.vmem [shape: f32[32,32], index: 4, kind: input, shape index: {}]
  %s5 = inlined_call_operand.vmem [shape: f32[32,32], index: 5, kind: input, shape index: {}]
  %s6 = inlined_call_operand.vmem [shape: f32[32,1], index: 6, kind: input, shape index: {}]
  %s7 = inlined_call_operand.vmem [shape: f32[32,32], index: 7, kind: input, shape index: {}]
  %s8 = inlined_call_operand.vmem [shape: f32[32,1], index: 8, kind: input, shape index: {}]
  %s9 = inlined_call_operand.vmem [shape: f32[2,32], index: 9, kind: input, shape index: {}]
  %s10 = inlined_call_operand.vmem [shape: f32[2,1], index: 10, kind: input, shape index: {}]
  %s11 = inlined_call_operand.hbm [shape: f32[2,200], index: 11, kind: output, shape index: {}]
  %s12 = sld [smem:[#allocation0]]
  $region77: #{tpu_custom_call.1} parent=0
    _
  %s14 = ssub.s32 1, %s12
  %s15 = scalar_select 0, %s14, %s12
  $region1: #{tpu_custom_call.1} parent=0
    #allocation2 [shape = 'u8[2048]{0}', space=vmem, size = 0x800, scoped, tag = 'output window, operand 0']
    #allocation3 [shape = 's32[2]{0}', space=sflag, size = 0x8, scoped, tag = 'scoped memory for tpu_custom_call.1']
    %16 = vsyncpa [#allocation3], 0
    %s17 = scalar_lea.sflag [#allocation3], 1
    %18 = vsyncpa %s17, 0
    loop: start=0, step=1, limit=4
    $region2: #{tpu_custom_call.1} parent=1 // loop_pre_header
      _
    $region3: #{tpu_custom_call.1} parent=1 // loop_header
      %s20 = sphi 0, %s24
      %p21 = scmp.ge.s32.totalorder %s20, 4
      %s30 = sphi 0, %s32
      %s33 = sphi 0, %s30
      %s34 = sphi 0, %s33
      %s50 = sphi 0, %s34
      %s56 = sphi 0, %s58
      %s59 = sphi 0, %s56
      %s60 = sphi 0, %s59
      %s76 = sphi 0, %s60
      %s80 = sphi 0, %s80
      %s82 = sphi 0, %s80
      %s83 = sphi 0, %s82
      %s97 = sphi 0, %s83
      %s101 = sphi 0, %s101
      %s103 = sphi 0, %s101
      %s104 = sphi 0, %s103
      %s118 = sphi 0, %s104
      %s122 = sphi 0, %s122
      %s124 = sphi 0, %s122
      %s125 = sphi 0, %s124
      %s139 = sphi 0, %s125
      %s143 = sphi 0, %s143
      %s145 = sphi 0, %s143
      %s146 = sphi 0, %s145
      %s160 = sphi 0, %s146
      %s164 = sphi 0, %s164
      %s166 = sphi 0, %s164
      %s167 = sphi 0, %s166
      %s181 = sphi 0, %s167
      %s185 = sphi 0, %s185
      %s187 = sphi 0, %s185
      %s188 = sphi 0, %s187
      %s202 = sphi 0, %s188
      %s206 = sphi 0, %s206
      %s208 = sphi 0, %s206
      %s209 = sphi 0, %s208
      %s223 = sphi 0, %s209
      %s227 = sphi 0, %s227
      %s229 = sphi 0, %s227
      %s230 = sphi 0, %s229
      %s244 = sphi 0, %s230
      %s248 = sphi 0, %s248
      %s250 = sphi 0, %s248
      %s251 = sphi 0, %s250
      %s265 = sphi 0, %s251
      %s271 = sphi 0, %s273
      %s274 = sphi 0, %s271
      %s275 = sphi 0, %s274
      %s291 = sphi 0, %s275
    $region4: #{tpu_custom_call.1} parent=1 // loop_header_branch
      %23 = sbr.rel (%p21) target = $region8
    $region5: #{tpu_custom_call.1} parent=1 // loop_body
      %s25 = ssub.s32 %s20, 1
      %s26 = ssub.s32 %s20, 2
      %s27 = sadd.s32 %s20, 1
      %s28 = ssub.s32 %s20, %s27
      %p29 = scmp.eq.s32.totalorder %s28, 0
      %s31 = sadd.s32 %s30, 1
      %s32 = scalar_select %p29, %s30, %s31
      %p35 = pneg %p29
      %p36 = scmp.eq.s32.totalorder %s20, 1
      %p37 = por %p35, %p36
      %p38 = scmp.ne.s32.totalorder %s30, %s33
      %p39 = scmp.eq.s32.totalorder %s20, 0
      %p40 = por %p38, %p39
      %p41 = scmp.ne.s32.totalorder %s30, %s33
      %p42 = scmp.eq.s32.totalorder %s25, 1
      %p43 = por %p41, %p42
      %p44 = scmp.ne.s32.totalorder %s33, %s34
      %p45 = scmp.eq.s32.totalorder %s25, 0
      %p46 = por %p44, %p45
      %p47 = scmp.ne.s32.totalorder %s33, %s34
      %p48 = scmp.eq.s32.totalorder %s26, 1
      %p49 = por %p47, %p48
      %p51 = scmp.ne.s32.totalorder %s34, %s50
      %p52 = scmp.eq.s32.totalorder %s26, 0
      %p53 = por %p51, %p52
      %s54 = ssub.s32 %s20, %s27
      %p55 = scmp.eq.s32.totalorder %s54, 0
      %s57 = sadd.s32 %s56, 1
      %s58 = scalar_select %p55, %s56, %s57
      %p61 = pneg %p55
      %p62 = scmp.eq.s32.totalorder %s20, 1
      %p63 = por %p61, %p62
      %p64 = scmp.ne.s32.totalorder %s56, %s59
      %p65 = scmp.eq.s32.totalorder %s20, 0
      %p66 = por %p64, %p65
      %p67 = scmp.ne.s32.totalorder %s56, %s59
      %p68 = scmp.eq.s32.totalorder %s25, 1
      %p69 = por %p67, %p68
      %p70 = scmp.ne.s32.totalorder %s59, %s60
      %p71 = scmp.eq.s32.totalorder %s25, 0
      %p72 = por %p70, %p71
      %p73 = scmp.ne.s32.totalorder %s59, %s60
      %p74 = scmp.eq.s32.totalorder %s26, 1
      %p75 = por %p73, %p74
      %p77 = scmp.ne.s32.totalorder %s60, %s76
      %p78 = scmp.eq.s32.totalorder %s26, 0
      %p79 = por %p77, %p78
      %s81 = sadd.s32 %s80, 1
      %p84 = scmp.eq.s32.totalorder %s20, 1
      %p85 = scmp.ne.s32.totalorder %s80, %s82
      %p86 = scmp.eq.s32.totalorder %s20, 0
      %p87 = por %p85, %p86
      %p88 = scmp.ne.s32.totalorder %s80, %s82
      %p89 = scmp.eq.s32.totalorder %s25, 1
      %p90 = por %p88, %p89
      %p91 = scmp.ne.s32.totalorder %s82, %s83
      %p92 = scmp.eq.s32.totalorder %s25, 0
      %p93 = por %p91, %p92
      %p94 = scmp.ne.s32.totalorder %s82, %s83
      %p95 = scmp.eq.s32.totalorder %s26, 1
      %p96 = por %p94, %p95
      %p98 = scmp.ne.s32.totalorder %s83, %s97
      %p99 = scmp.eq.s32.totalorder %s26, 0
      %p100 = por %p98, %p99
      %s102 = sadd.s32 %s101, 1
      %p105 = scmp.eq.s32.totalorder %s20, 1
      %p106 = scmp.ne.s32.totalorder %s101, %s103
      %p107 = scmp.eq.s32.totalorder %s20, 0
      %p108 = por %p106, %p107
      %p109 = scmp.ne.s32.totalorder %s101, %s103
      %p110 = scmp.eq.s32.totalorder %s25, 1
      %p111 = por %p109, %p110
      %p112 = scmp.ne.s32.totalorder %s103, %s104
      %p113 = scmp.eq.s32.totalorder %s25, 0
      %p114 = por %p112, %p113
      %p115 = scmp.ne.s32.totalorder %s103, %s104
      %p116 = scmp.eq.s32.totalorder %s26, 1
      %p117 = por %p115, %p116
      %p119 = scmp.ne.s32.totalorder %s104, %s118
      %p120 = scmp.eq.s32.totalorder %s26, 0
      %p121 = por %p119, %p120
      %s123 = sadd.s32 %s122, 1
      %p126 = scmp.eq.s32.totalorder %s20, 1
      %p127 = scmp.ne.s32.totalorder %s122, %s124
      %p128 = scmp.eq.s32.totalorder %s20, 0
      %p129 = por %p127, %p128
      %p130 = scmp.ne.s32.totalorder %s122, %s124
      %p131 = scmp.eq.s32.totalorder %s25, 1
      %p132 = por %p130, %p131
      %p133 = scmp.ne.s32.totalorder %s124, %s125
      %p134 = scmp.eq.s32.totalorder %s25, 0
      %p135 = por %p133, %p134
      %p136 = scmp.ne.s32.totalorder %s124, %s125
      %p137 = scmp.eq.s32.totalorder %s26, 1
      %p138 = por %p136, %p137
      %p140 = scmp.ne.s32.totalorder %s125, %s139
      %p141 = scmp.eq.s32.totalorder %s26, 0
      %p142 = por %p140, %p141
      %s144 = sadd.s32 %s143, 1
      %p147 = scmp.eq.s32.totalorder %s20, 1
      %p148 = scmp.ne.s32.totalorder %s143, %s145
      %p149 = scmp.eq.s32.totalorder %s20, 0
      %p150 = por %p148, %p149
      %p151 = scmp.ne.s32.totalorder %s143, %s145
      %p152 = scmp.eq.s32.totalorder %s25, 1
      %p153 = por %p151, %p152
      %p154 = scmp.ne.s32.totalorder %s145, %s146
      %p155 = scmp.eq.s32.totalorder %s25, 0
      %p156 = por %p154, %p155
      %p157 = scmp.ne.s32.totalorder %s145, %s146
      %p158 = scmp.eq.s32.totalorder %s26, 1
      %p159 = por %p157, %p158
      %p161 = scmp.ne.s32.totalorder %s146, %s160
      %p162 = scmp.eq.s32.totalorder %s26, 0
      %p163 = por %p161, %p162
      %s165 = sadd.s32 %s164, 1
      %p168 = scmp.eq.s32.totalorder %s20, 1
      %p169 = scmp.ne.s32.totalorder %s164, %s166
      %p170 = scmp.eq.s32.totalorder %s20, 0
      %p171 = por %p169, %p170
      %p172 = scmp.ne.s32.totalorder %s164, %s166
      %p173 = scmp.eq.s32.totalorder %s25, 1
      %p174 = por %p172, %p173
      %p175 = scmp.ne.s32.totalorder %s166, %s167
      %p176 = scmp.eq.s32.totalorder %s25, 0
      %p177 = por %p175, %p176
      %p178 = scmp.ne.s32.totalorder %s166, %s167
      %p179 = scmp.eq.s32.totalorder %s26, 1
      %p180 = por %p178, %p179
      %p182 = scmp.ne.s32.totalorder %s167, %s181
      %p183 = scmp.eq.s32.totalorder %s26, 0
      %p184 = por %p182, %p183
      %s186 = sadd.s32 %s185, 1
      %p189 = scmp.eq.s32.totalorder %s20, 1
      %p190 = scmp.ne.s32.totalorder %s185, %s187
      %p191 = scmp.eq.s32.totalorder %s20, 0
      %p192 = por %p190, %p191
      %p193 = scmp.ne.s32.totalorder %s185, %s187
      %p194 = scmp.eq.s32.totalorder %s25, 1
      %p195 = por %p193, %p194
      %p196 = scmp.ne.s32.totalorder %s187, %s188
      %p197 = scmp.eq.s32.totalorder %s25, 0
      %p198 = por %p196, %p197
      %p199 = scmp.ne.s32.totalorder %s187, %s188
      %p200 = scmp.eq.s32.totalorder %s26, 1
      %p201 = por %p199, %p200
      %p203 = scmp.ne.s32.totalorder %s188, %s202
      %p204 = scmp.eq.s32.totalorder %s26, 0
      %p205 = por %p203, %p204
      %s207 = sadd.s32 %s206, 1
      %p210 = scmp.eq.s32.totalorder %s20, 1
      %p211 = scmp.ne.s32.totalorder %s206, %s208
      %p212 = scmp.eq.s32.totalorder %s20, 0
      %p213 = por %p211, %p212
      %p214 = scmp.ne.s32.totalorder %s206, %s208
      %p215 = scmp.eq.s32.totalorder %s25, 1
      %p216 = por %p214, %p215
      %p217 = scmp.ne.s32.totalorder %s208, %s209
      %p218 = scmp.eq.s32.totalorder %s25, 0
      %p219 = por %p217, %p218
      %p220 = scmp.ne.s32.totalorder %s208, %s209
      %p221 = scmp.eq.s32.totalorder %s26, 1
      %p222 = por %p220, %p221
      %p224 = scmp.ne.s32.totalorder %s209, %s223
      %p225 = scmp.eq.s32.totalorder %s26, 0
      %p226 = por %p224, %p225
      %s228 = sadd.s32 %s227, 1
      %p231 = scmp.eq.s32.totalorder %s20, 1
      %p232 = scmp.ne.s32.totalorder %s227, %s229
      %p233 = scmp.eq.s32.totalorder %s20, 0
      %p234 = por %p232, %p233
      %p235 = scmp.ne.s32.totalorder %s227, %s229
      %p236 = scmp.eq.s32.totalorder %s25, 1
      %p237 = por %p235, %p236
      %p238 = scmp.ne.s32.totalorder %s229, %s230
      %p239 = scmp.eq.s32.totalorder %s25, 0
      %p240 = por %p238, %p239
      %p241 = scmp.ne.s32.totalorder %s229, %s230
      %p242 = scmp.eq.s32.totalorder %s26, 1
      %p243 = por %p241, %p242
      %p245 = scmp.ne.s32.totalorder %s230, %s244
      %p246 = scmp.eq.s32.totalorder %s26, 0
      %p247 = por %p245, %p246
      %s249 = sadd.s32 %s248, 1
      %p252 = scmp.eq.s32.totalorder %s20, 1
      %p253 = scmp.ne.s32.totalorder %s248, %s250
      %p254 = scmp.eq.s32.totalorder %s20, 0
      %p255 = por %p253, %p254
      %p256 = scmp.ne.s32.totalorder %s248, %s250
      %p257 = scmp.eq.s32.totalorder %s25, 1
      %p258 = por %p256, %p257
      %p259 = scmp.ne.s32.totalorder %s250, %s251
      %p260 = scmp.eq.s32.totalorder %s25, 0
      %p261 = por %p259, %p260
      %p262 = scmp.ne.s32.totalorder %s250, %s251
      %p263 = scmp.eq.s32.totalorder %s26, 1
      %p264 = por %p262, %p263
      %p266 = scmp.ne.s32.totalorder %s251, %s265
      %p267 = scmp.eq.s32.totalorder %s26, 0
      %p268 = por %p266, %p267
      %s269 = ssub.s32 %s20, %s27
      %p270 = scmp.eq.s32.totalorder %s269, 0
      %s272 = sadd.s32 %s271, 1
      %s273 = scalar_select %p270, %s271, %s272
      %p276 = pneg %p270
      %p277 = scmp.eq.s32.totalorder %s20, 1
      %p278 = por %p276, %p277
      %p279 = scmp.ne.s32.totalorder %s271, %s274
      %p280 = scmp.eq.s32.totalorder %s20, 0
      %p281 = por %p279, %p280
      %p282 = scmp.ne.s32.totalorder %s271, %s274
      %p283 = scmp.eq.s32.totalorder %s25, 1
      %p284 = por %p282, %p283
      %p285 = scmp.ne.s32.totalorder %s274, %s275
      %p286 = scmp.eq.s32.totalorder %s25, 0
      %p287 = por %p285, %p286
      %p288 = scmp.ne.s32.totalorder %s274, %s275
      %p289 = scmp.eq.s32.totalorder %s26, 1
      %p290 = por %p288, %p289
      %p292 = scmp.ne.s32.totalorder %s275, %s291
      %p293 = scmp.eq.s32.totalorder %s26, 0
      %p294 = por %p292, %p293
      %p295 = scmp.le.s32.totalorder 1, %s20
      %p296 = scmp.lt.s32.totalorder %s20, 3
      %p297 = pnand %p295, %p296
      %p298 = pneg %p297
      // Predicated region
      $region9: #{tpu_custom_call.1} parent=5 // pred_check
        _
      $region10: #{tpu_custom_call.1} parent=5 // pred_check_branch
        %300 = sbr.rel (%p297) target = $region12
      $region11: #{tpu_custom_call.1} parent=5 // pred_region
        %s301 = ssub.s32 %s20, 1
        // Predicated region
        $region13: #{tpu_custom_call.1} parent=11 // pred_check
          %p302 = pneg %p93
        $region14: #{tpu_custom_call.1} parent=11 // pred_check_branch
          %304 = sbr.rel (%p302) target = $region16
        $region15: #{tpu_custom_call.1} parent=11 // pred_region
          _
        $region16: #{tpu_custom_call.1} parent=11 // pred_fallthru
          _
        // Predicated region
        $region17: #{tpu_custom_call.1} parent=11 // pred_check
          %p305 = pneg %p114
        $region18: #{tpu_custom_call.1} parent=11 // pred_check_branch
          %307 = sbr.rel (%p305) target = $region20
        $region19: #{tpu_custom_call.1} parent=11 // pred_region
          _
        $region20: #{tpu_custom_call.1} parent=11 // pred_fallthru
          _
        // Predicated region
        $region21: #{tpu_custom_call.1} parent=11 // pred_check
          %p308 = pneg %p135
        $region22: #{tpu_custom_call.1} parent=11 // pred_check_branch
          %310 = sbr.rel (%p308) target = $region24
        $region23: #{tpu_custom_call.1} parent=11 // pred_region
          _
        $region24: #{tpu_custom_call.1} parent=11 // pred_fallthru
          _
        // Predicated region
        $region25: #{tpu_custom_call.1} parent=11 // pred_check
          %p311 = pneg %p156
        $region26: #{tpu_custom_call.1} parent=11 // pred_check_branch
          %313 = sbr.rel (%p311) target = $region28
        $region27: #{tpu_custom_call.1} parent=11 // pred_region
          _
        $region28: #{tpu_custom_call.1} parent=11 // pred_fallthru
          _
        // Predicated region
        $region29: #{tpu_custom_call.1} parent=11 // pred_check
          %p314 = pneg %p177
        $region30: #{tpu_custom_call.1} parent=11 // pred_check_branch
          %316 = sbr.rel (%p314) target = $region32
        $region31: #{tpu_custom_call.1} parent=11 // pred_region
          _
        $region32: #{tpu_custom_call.1} parent=11 // pred_fallthru
          _
        // Predicated region
        $region33: #{tpu_custom_call.1} parent=11 // pred_check
          %p317 = pneg %p198
        $region34: #{tpu_custom_call.1} parent=11 // pred_check_branch
          %319 = sbr.rel (%p317) target = $region36
        $region35: #{tpu_custom_call.1} parent=11 // pred_region
          _
        $region36: #{tpu_custom_call.1} parent=11 // pred_fallthru
          _
        // Predicated region
        $region37: #{tpu_custom_call.1} parent=11 // pred_check
          %p320 = pneg %p219
        $region38: #{tpu_custom_call.1} parent=11 // pred_check_branch
          %322 = sbr.rel (%p320) target = $region40
        $region39: #{tpu_custom_call.1} parent=11 // pred_region
          _
        $region40: #{tpu_custom_call.1} parent=11 // pred_fallthru
          _
        // Predicated region
        $region41: #{tpu_custom_call.1} parent=11 // pred_check
          %p323 = pneg %p240
        $region42: #{tpu_custom_call.1} parent=11 // pred_check_branch
          %325 = sbr.rel (%p323) target = $region44
        $region43: #{tpu_custom_call.1} parent=11 // pred_region
          _
        $region44: #{tpu_custom_call.1} parent=11 // pred_fallthru
          _
        // Predicated region
        $region45: #{tpu_custom_call.1} parent=11 // pred_check
          %p326 = pneg %p261
        $region46: #{tpu_custom_call.1} parent=11 // pred_check_branch
          %328 = sbr.rel (%p326) target = $region48
        $region47: #{tpu_custom_call.1} parent=11 // pred_region
          _
        $region48: #{tpu_custom_call.1} parent=11 // pred_fallthru
          _
      $region12: #{tpu_custom_call.1} parent=5 // pred_fallthru
        _
      %p329 = scmp.lt.s32.totalorder %s20, 2
      // Predicated region
      $region49: #{tpu_custom_call.1} parent=5 // pred_check
        %p330 = pneg %p329
      $region50: #{tpu_custom_call.1} parent=5 // pred_check_branch
        %332 = sbr.rel (%p330) target = $region52
      $region51: #{tpu_custom_call.1} parent=5 // pred_region
        // Predicated region
        $region53: #{tpu_custom_call.1} parent=51 // pred_check
          %p333 = pneg %p40
        $region54: #{tpu_custom_call.1} parent=51 // pred_check_branch
          %335 = sbr.rel (%p333) target = $region56
        $region55: #{tpu_custom_call.1} parent=51 // pred_region
          %s336 = smul.u32 16, %s20
          %s337 = ssub.s32 25, %s336
          %p338 = scmp.lt.s32.totalorder %s337, 16
          %s339 = scalar_select %p338, %s337, 16
          %s340 = smul.u32 128, %s339
          %p341 = scmp.lt.s32.totalorder %s336, 24
          %s342 = scalar_select %p341, %s336, 24
          %s343 = smul.addr %s342, 8
          %s344 = scalar_lea.vmem %s0, %s343
          %s345 = smul.u32 16, %s20
          %s346 = ssub.s32 25, %s345
          %p347 = scmp.lt.s32.totalorder %s346, 16
          %s348 = scalar_select %p347, %s346, 16
          %s349 = smul.u32 128, %s348
        $region56: #{tpu_custom_call.1} parent=51 // pred_fallthru
          _
        // Predicated region
        $region57: #{tpu_custom_call.1} parent=51 // pred_check
          %p350 = pneg %p66
        $region58: #{tpu_custom_call.1} parent=51 // pred_check_branch
          %352 = sbr.rel (%p350) target = $region60
        $region59: #{tpu_custom_call.1} parent=51 // pred_region
          %s353 = smul.u32 16, %s20
          %s354 = ssub.s32 25, %s353
          %p355 = scmp.lt.s32.totalorder %s354, 16
          %s356 = scalar_select %p355, %s354, 16
          %s357 = smul.u32 128, %s356
          %p358 = scmp.lt.s32.totalorder %s353, 24
          %s359 = scalar_select %p358, %s353, 24
          %s360 = smul.addr %s359, 8
          %s361 = scalar_lea.vmem %s1, %s360
          %s362 = smul.u32 16, %s20
          %s363 = ssub.s32 25, %s362
          %p364 = scmp.lt.s32.totalorder %s363, 16
          %s365 = scalar_select %p364, %s363, 16
          %s366 = smul.u32 128, %s365
        $region60: #{tpu_custom_call.1} parent=51 // pred_fallthru
          _
      $region52: #{tpu_custom_call.1} parent=5 // pred_fallthru
        _
      %p367 = scmp.le.s32.totalorder 1, %s20
      %p368 = scmp.lt.s32.totalorder %s20, 3
      %p369 = pnand %p367, %p368
      %p370 = pneg %p369
      // Predicated region
      $region61: #{tpu_custom_call.1} parent=5 // pred_check
        _
      $region62: #{tpu_custom_call.1} parent=5 // pred_check_branch
        %372 = sbr.rel (%p369) target = $region64
      $region63: #{tpu_custom_call.1} parent=5 // pred_region
        %s373 = ssub.s32 %s20, 1
        %s374 = smul.u32 16, %s25
        %s375 = ssub.s32 25, %s374
        %p376 = scmp.lt.s32.totalorder %s375, 16
        %s377 = scalar_select %p376, %s375, 16
        %s378 = smul.u32 128, %s377
        %p379 = scmp.lt.s32.totalorder %s374, 24
        %s380 = scalar_select %p379, %s374, 24
        %s381 = smul.addr %s380, 8
        %s382 = scalar_lea.vmem %s0, %s381
        %p383 = pneg %p46
        %p384 = pneg %p43
        %s385 = smul.u32 16, %s25
        %s386 = ssub.s32 25, %s385
        %p387 = scmp.lt.s32.totalorder %s386, 16
        %s388 = scalar_select %p387, %s386, 16
        %s389 = smul.u32 128, %s388
        %p390 = scmp.lt.s32.totalorder %s385, 24
        %s391 = scalar_select %p390, %s385, 24
        %s392 = smul.addr %s391, 8
        %s393 = scalar_lea.vmem %s1, %s392
        %p394 = pneg %p72
        %p395 = pneg %p69
        %p396 = pneg %p93
        %p397 = pneg %p90
        %p398 = pneg %p114
        %p399 = pneg %p111
        %p400 = pneg %p135
        %p401 = pneg %p132
        %p402 = pneg %p156
        %p403 = pneg %p153
        %p404 = pneg %p177
        %p405 = pneg %p174
        %p406 = pneg %p198
        %p407 = pneg %p195
        %p408 = pneg %p219
        %p409 = pneg %p216
        %p410 = pneg %p240
        %p411 = pneg %p237
        %p412 = pneg %p261
        %p413 = pneg %p258
        %p414 = pneg %p287
        %p415 = pneg %p284
        %s416 = sand.u32 %s274, 1
        %s417 = scalar_lea.sflag [#allocation3], %s416
        %s418 = sand.u32 %s274, 1
        %s419 = smul.addr %s418, 2
        %s420 = scalar_lea.vmem [#allocation2], %s419
        %s421 = smul.u32 16, %s25
        %s422 = ssub.s32 25, %s421
        %p423 = scmp.lt.s32.totalorder %s422, 16
        %s424 = scalar_select %p423, %s422, 16
        %s425 = smul.u32 128, %s424
        %p426 = scmp.lt.s32.totalorder %s421, 24
        %s427 = scalar_select %p426, %s421, 24
        %s428 = smul.addr %s427, 8
        %s429 = scalar_lea.vmem %s0, %s428
        %s430 = smul.u32 16, %s25
        %s431 = ssub.s32 25, %s430
        %p432 = scmp.lt.s32.totalorder %s431, 16
        %s433 = scalar_select %p432, %s431, 16
        %s434 = smul.u32 128, %s433
        %s435 = smul.u32 16, %s25
        %s436 = ssub.s32 25, %s435
        %p437 = scmp.lt.s32.totalorder %s436, 16
        %s438 = scalar_select %p437, %s436, 16
        %s439 = smul.u32 128, %s438
        %p440 = scmp.lt.s32.totalorder %s435, 24
        %s441 = scalar_select %p440, %s435, 24
        %s442 = smul.addr %s441, 8
        %s443 = scalar_lea.vmem %s1, %s442
        %s444 = smul.u32 16, %s25
        %s445 = ssub.s32 25, %s444
        %p446 = scmp.lt.s32.totalorder %s445, 16
        %s447 = scalar_select %p446, %s445, 16
        %s448 = smul.u32 128, %s447
        %v449 = vld [vmem:[%s429] sm:$0xff]
        %v450 = vld [vmem:[%s429 + $0x8] sm:$0xff]
        %v451 = vld [vmem:[%s429 + $0x10] sm:$0xff]
        %v452 = vld [vmem:[%s429 + $0x18] sm:$0xff]
        %v453 = vld [vmem:[%s429 + $0x20] sm:$0xff]
        %v454 = vld [vmem:[%s429 + $0x28] sm:$0xff]
        %v455 = vld [vmem:[%s429 + $0x30] sm:$0xff]
        %v456 = vld [vmem:[%s429 + $0x38] sm:$0xff]
        %v457 = vld [vmem:[%s429 + $0x40] sm:$0xff]
        %v458 = vld [vmem:[%s429 + $0x48] sm:$0xff]
        %v459 = vld [vmem:[%s429 + $0x50] sm:$0xff]
        %v460 = vld [vmem:[%s429 + $0x58] sm:$0xff]
        %v461 = vld [vmem:[%s429 + $0x60] sm:$0xff]
        %v462 = vld [vmem:[%s429 + $0x68] sm:$0xff]
        %v463 = vld [vmem:[%s429 + $0x70] sm:$0xff]
        %v464 = vld [vmem:[%s429 + $0x78] sm:$0xff]
        %v465 = vld [vmem:[%s443] sm:$0xff]
        %v466 = vld [vmem:[%s443 + $0x8] sm:$0xff]
        %v467 = vld [vmem:[%s443 + $0x10] sm:$0xff]
        %v468 = vld [vmem:[%s443 + $0x18] sm:$0xff]
        %v469 = vld [vmem:[%s443 + $0x20] sm:$0xff]
        %v470 = vld [vmem:[%s443 + $0x28] sm:$0xff]
        %v471 = vld [vmem:[%s443 + $0x30] sm:$0xff]
        %v472 = vld [vmem:[%s443 + $0x38] sm:$0xff]
        %v473 = vld [vmem:[%s443 + $0x40] sm:$0xff]
        %v474 = vld [vmem:[%s443 + $0x48] sm:$0xff]
        %v475 = vld [vmem:[%s443 + $0x50] sm:$0xff]
        %v476 = vld [vmem:[%s443 + $0x58] sm:$0xff]
        %v477 = vld [vmem:[%s443 + $0x60] sm:$0xff]
        %v478 = vld [vmem:[%s443 + $0x68] sm:$0xff]
        %v479 = vld [vmem:[%s443 + $0x70] sm:$0xff]
        %v480 = vld [vmem:[%s443 + $0x78] sm:$0xff]
        %v481 = vld [vmem:[%s2] sm:$0xff]
        %v482 = vld [vmem:[%s2 + $0x8] sm:$0xff]
        %v483 = vld [vmem:[%s2 + $0x10] sm:$0xff]
        %v484 = vld [vmem:[%s2 + $0x18] sm:$0xff]
        %v485 = vld [vmem:[%s3] sm:$0xff]
        %v486 = vld [vmem:[%s3 + $0x8] sm:$0xff]
        %v487 = vld [vmem:[%s3 + $0x10] sm:$0xff]
        %v488 = vld [vmem:[%s3 + $0x18] sm:$0xff]
        %490 = vset.pattern.permute.xlu0 0
        %491 = vperm.xlu0 %490, %v485
        %v492 = vpop.permute.xlu0 %491
        %495 = vset.pattern.permute.xlu0 0
        %496 = vperm.xlu0 %495, %v486
        %v497 = vpop.permute.xlu0 %496
        %500 = vset.pattern.permute.xlu0 0
        %501 = vperm.xlu0 %500, %v487
        %v502 = vpop.permute.xlu0 %501
        %505 = vset.pattern.permute.xlu0 0
        %506 = vperm.xlu0 %505, %v488
        %v507 = vpop.permute.xlu0 %506
        %vm509 = vcmask 130048
        %v511 = vsel %vm509, %v481, 0
        %v514 = vsel %vm509, %v482, 0
        %v517 = vsel %vm509, %v483, 0
        %v520 = vsel %vm509, %v484, 0
        %v523 = vsel %vm509, %v465, 0
        %v526 = vsel %vm509, %v466, 0
        %v529 = vsel %vm509, %v467, 0
        %v532 = vsel %vm509, %v468, 0
        %v535 = vsel %vm509, %v469, 0
        %v538 = vsel %vm509, %v470, 0
        %v541 = vsel %vm509, %v471, 0
        %v544 = vsel %vm509, %v472, 0
        %v547 = vsel %vm509, %v473, 0
        %v550 = vsel %vm509, %v474, 0
        %v553 = vsel %vm509, %v475, 0
        %v556 = vsel %vm509, %v476, 0
        %v559 = vsel %vm509, %v477, 0
        %v562 = vsel %vm509, %v478, 0
        %v565 = vsel %vm509, %v479, 0
        %v568 = vsel %vm509, %v480, 0
        %570 = vmatprep.subr.mxu0 0.0
        %571 = vmatpush1.xpose.msra.mxu0 %v568
        %572 = vmatprep.subr.mxu0 0.0
        %573 = vmatpush1.xpose.msra.mxu0 %v565
        %574 = vmatprep.subr.mxu0 0.0
        %575 = vmatpush1.xpose.msra.mxu0 %v562
        %576 = vmatprep.subr.mxu0 0.0
        %577 = vmatpush1.xpose.msra.mxu0 %v559
        %578 = vmatprep.subr.mxu0 0.0
        %579 = vmatpush1.xpose.msra.mxu0 %v556
        %580 = vmatprep.subr.mxu0 0.0
        %581 = vmatpush1.xpose.msra.mxu0 %v553
        %582 = vmatprep.subr.mxu0 0.0
        %583 = vmatpush1.xpose.msra.mxu0 %v550
        %584 = vmatprep.subr.mxu0 0.0
        %585 = vmatpush1.xpose.msra.mxu0 %v547
        %586 = vmatprep.subr.mxu0 0.0
        %587 = vmatpush1.xpose.msra.mxu0 %v544
        %588 = vmatprep.subr.mxu0 0.0
        %589 = vmatpush1.xpose.msra.mxu0 %v541
        %590 = vmatprep.subr.mxu0 0.0
        %591 = vmatpush1.xpose.msra.mxu0 %v538
        %592 = vmatprep.subr.mxu0 0.0
        %593 = vmatpush1.xpose.msra.mxu0 %v535
        %594 = vmatprep.subr.mxu0 0.0
        %595 = vmatpush1.xpose.msra.mxu0 %v532
        %596 = vmatprep.subr.mxu0 0.0
        %597 = vmatpush1.xpose.msra.mxu0 %v529
        %598 = vmatprep.subr.mxu0 0.0
        %599 = vmatpush1.xpose.msra.mxu0 %v526
        %600 = vmatprep.subr.mxu0 0.0
        %601 = vmatpush1.xpose.msra.mxu0 %v523
        %602 = vmatprep.subr.mxu0 0.0
        %603 = vmatpush2.xpose.msra.mxu0 0.0
        %604 = vmatprep.subr.mxu0 0.0
        %605 = vmatpush2.xpose.msra.mxu0 0.0
        %606 = vmatprep.subr.mxu0 0.0
        %607 = vmatpush2.xpose.msra.mxu0 0.0
        %608 = vmatprep.subr.mxu0 0.0
        %609 = vmatpush2.xpose.msra.mxu0 0.0
        %610 = vmatprep.subr.mxu0 0.0
        %611 = vmatpush2.xpose.msra.mxu0 0.0
        %612 = vmatprep.subr.mxu0 0.0
        %613 = vmatpush2.xpose.msra.mxu0 0.0
        %614 = vmatprep.subr.mxu0 0.0
        %615 = vmatpush2.xpose.msra.mxu0 0.0
        %616 = vmatprep.subr.mxu0 0.0
        %617 = vmatpush2.xpose.msra.mxu0 0.0
        %618 = vmatprep.subr.mxu0 0.0
        %619 = vmatpush2.xpose.msra.mxu0 0.0
        %620 = vmatprep.subr.mxu0 0.0
        %621 = vmatpush2.xpose.msra.mxu0 0.0
        %622 = vmatprep.subr.mxu0 0.0
        %623 = vmatpush2.xpose.msra.mxu0 0.0
        %624 = vmatprep.subr.mxu0 0.0
        %625 = vmatpush2.xpose.msra.mxu0 0.0
        %626 = vmatprep.subr.mxu0 0.0
        %627 = vmatpush2.xpose.msra.mxu0 0.0
        %628 = vmatprep.subr.mxu0 0.0
        %629 = vmatpush2.xpose.msra.mxu0 0.0
        %630 = vmatprep.subr.mxu0 0.0
        %631 = vmatpush2.xpose.msra.mxu0 0.0
        %632 = vmatprep.subr.mxu0 0.0
        %633 = vmatpush2.xpose.msra.mxu0 0.0
        %634 = vmatprep.mubr.f32.mxu0 0.0
        %635 = vmatmul.mubr.f32.gmra.mxu0 %v511
        %v636 = vpop.f32.mrf.mxu0
        %v637 = vadd.f32 %v492, %v636
        %v638 = vpop.f32.mrf.mxu0
        %639 = vmatprep.mubr.f32.mxu0 0.0
        %640 = vmatmul.mubr.f32.gmra.mxu0 %v514
        %v641 = vpop.f32.mrf.mxu0
        %v642 = vadd.f32 %v497, %v641
        %v643 = vpop.f32.mrf.mxu0
        %644 = vmatprep.mubr.f32.mxu0 0.0
        %645 = vmatmul.mubr.f32.gmra.mxu0 %v517
        %v646 = vpop.f32.mrf.mxu0
        %v647 = vadd.f32 %v502, %v646
        %v648 = vpop.f32.mrf.mxu0
        %649 = vmatprep.mubr.f32.mxu0 0.0
        %650 = vmatmul.mubr.f32.gmra.mxu0 %v520
        %v651 = vpop.f32.mrf.mxu0
        %v652 = vadd.f32 %v507, %v651
        %v653 = vpop.f32.mrf.mxu0
        %654 = vdwg.mxu0
        %v655 = vmax.f32 %v637, 0.0
        %v656 = vmax.f32 %v642, 0.0
        %v657 = vmax.f32 %v647, 0.0
        %v658 = vmax.f32 %v652, 0.0
        %v659 = vld [vmem:[%s4] sm:$0xff]
        %v660 = vld [vmem:[%s4 + $0x8] sm:$0xff]
        %v661 = vld [vmem:[%s4 + $0x10] sm:$0xff]
        %v662 = vld [vmem:[%s4 + $0x18] sm:$0xff]
        %v663 = vld [vmem:[%s5] sm:$0xff]
        %v664 = vld [vmem:[%s5 + $0x8] sm:$0xff]
        %v665 = vld [vmem:[%s5 + $0x10] sm:$0xff]
        %v666 = vld [vmem:[%s5 + $0x18] sm:$0xff]
        %vm667 = vcmask 261120
        %v669 = vsel %vm667, %v663, 0
        %v672 = vsel %vm667, %v664, 0
        %v675 = vsel %vm667, %v665, 0
        %v678 = vsel %vm667, %v666, 0
        %680 = vmatprep.subr.mxu0 0.0
        %681 = vmatpush1.msra.mxu0 0.0
        %682 = vmatprep.subr.mxu0 0.0
        %683 = vmatpush1.msra.mxu0 0.0
        %684 = vmatprep.subr.mxu0 0.0
        %685 = vmatpush1.msra.mxu0 0.0
        %686 = vmatprep.subr.mxu0 0.0
        %687 = vmatpush1.msra.mxu0 0.0
        %688 = vmatprep.subr.mxu0 0.0
        %689 = vmatpush1.msra.mxu0 0.0
        %690 = vmatprep.subr.mxu0 0.0
        %691 = vmatpush1.msra.mxu0 0.0
        %692 = vmatprep.subr.mxu0 0.0
        %693 = vmatpush1.msra.mxu0 0.0
        %694 = vmatprep.subr.mxu0 0.0
        %695 = vmatpush1.msra.mxu0 0.0
        %696 = vmatprep.subr.mxu0 0.0
        %697 = vmatpush1.msra.mxu0 0.0
        %698 = vmatprep.subr.mxu0 0.0
        %699 = vmatpush1.msra.mxu0 0.0
        %700 = vmatprep.subr.mxu0 0.0
        %701 = vmatpush1.msra.mxu0 0.0
        %702 = vmatprep.subr.mxu0 0.0
        %703 = vmatpush1.msra.mxu0 0.0
        %704 = vmatprep.subr.mxu0 0.0
        %705 = vmatpush1.msra.mxu0 %v658
        %706 = vmatprep.subr.mxu0 0.0
        %707 = vmatpush1.msra.mxu0 %v657
        %708 = vmatprep.subr.mxu0 0.0
        %709 = vmatpush1.msra.mxu0 %v656
        %710 = vmatprep.subr.mxu0 0.0
        %711 = vmatpush1.msra.mxu0 %v655
        %712 = vmatprep.subr.mxu0 0.0
        %713 = vmatpush2.msra.mxu0 0.0
        %714 = vmatprep.subr.mxu0 0.0
        %715 = vmatpush2.msra.mxu0 0.0
        %716 = vmatprep.subr.mxu0 0.0
        %717 = vmatpush2.msra.mxu0 0.0
        %718 = vmatprep.subr.mxu0 0.0
        %719 = vmatpush2.msra.mxu0 0.0
        %720 = vmatprep.subr.mxu0 0.0
        %721 = vmatpush2.msra.mxu0 0.0
        %722 = vmatprep.subr.mxu0 0.0
        %723 = vmatpush2.msra.mxu0 0.0
        %724 = vmatprep.subr.mxu0 0.0
        %725 = vmatpush2.msra.mxu0 0.0
        %726 = vmatprep.subr.mxu0 0.0
        %727 = vmatpush2.msra.mxu0 0.0
        %728 = vmatprep.subr.mxu0 0.0
        %729 = vmatpush2.msra.mxu0 0.0
        %730 = vmatprep.subr.mxu0 0.0
        %731 = vmatpush2.msra.mxu0 0.0
        %732 = vmatprep.subr.mxu0 0.0
        %733 = vmatpush2.msra.mxu0 0.0
        %734 = vmatprep.subr.mxu0 0.0
        %735 = vmatpush2.msra.mxu0 0.0
        %736 = vmatprep.subr.mxu0 0.0
        %737 = vmatpush2.msra.mxu0 0.0
        %738 = vmatprep.subr.mxu0 0.0
        %739 = vmatpush2.msra.mxu0 0.0
        %740 = vmatprep.subr.mxu0 0.0
        %741 = vmatpush2.msra.mxu0 0.0
        %742 = vmatprep.subr.mxu0 0.0
        %743 = vmatpush2.msra.mxu0 0.0
        %744 = vmatprep.mubr.f32.mxu0 0.0
        %745 = vmatmul.mubr.f32.gmra.mxu0 %v669
        %v746 = vpop.f32.mrf.mxu0
        %v747 = vadd.f32 0.0, %v746
        %v748 = vpop.f32.mrf.mxu0
        %749 = vmatprep.mubr.f32.mxu0 0.0
        %750 = vmatmul.mubr.f32.gmra.mxu0 %v672
        %v751 = vpop.f32.mrf.mxu0
        %v752 = vadd.f32 0.0, %v751
        %v753 = vpop.f32.mrf.mxu0
        %754 = vmatprep.mubr.f32.mxu0 0.0
        %755 = vmatmul.mubr.f32.gmra.mxu0 %v675
        %v756 = vpop.f32.mrf.mxu0
        %v757 = vadd.f32 0.0, %v756
        %v758 = vpop.f32.mrf.mxu0
        %759 = vmatprep.mubr.f32.mxu0 0.0
        %760 = vmatmul.mubr.f32.gmra.mxu0 %v678
        %v761 = vpop.f32.mrf.mxu0
        %v762 = vadd.f32 0.0, %v761
        %v763 = vpop.f32.mrf.mxu0
        %764 = vdwg.mxu0
        %v766 = vsel %vm667, %v659, 0
        %v769 = vsel %vm667, %v660, 0
        %v772 = vsel %vm667, %v661, 0
        %v775 = vsel %vm667, %v662, 0
        %v778 = vsel %vm667, %v449, 0
        %v781 = vsel %vm667, %v450, 0
        %v784 = vsel %vm667, %v451, 0
        %v787 = vsel %vm667, %v452, 0
        %v790 = vsel %vm667, %v453, 0
        %v793 = vsel %vm667, %v454, 0
        %v796 = vsel %vm667, %v455, 0
        %v799 = vsel %vm667, %v456, 0
        %v802 = vsel %vm667, %v457, 0
        %v805 = vsel %vm667, %v458, 0
        %v808 = vsel %vm667, %v459, 0
        %v811 = vsel %vm667, %v460, 0
        %v814 = vsel %vm667, %v461, 0
        %v817 = vsel %vm667, %v462, 0
        %v820 = vsel %vm667, %v463, 0
        %v823 = vsel %vm667, %v464, 0
        %825 = vmatprep.subr.mxu0 0.0
        %826 = vmatpush1.xpose.msra.mxu0 %v823
        %827 = vmatprep.subr.mxu0 0.0
        %828 = vmatpush1.xpose.msra.mxu0 %v820
        %829 = vmatprep.subr.mxu0 0.0
        %830 = vmatpush1.xpose.msra.mxu0 %v817
        %831 = vmatprep.subr.mxu0 0.0
        %832 = vmatpush1.xpose.msra.mxu0 %v814
        %833 = vmatprep.subr.mxu0 0.0
        %834 = vmatpush1.xpose.msra.mxu0 %v811
        %835 = vmatprep.subr.mxu0 0.0
        %836 = vmatpush1.xpose.msra.mxu0 %v808
        %837 = vmatprep.subr.mxu0 0.0
        %838 = vmatpush1.xpose.msra.mxu0 %v805
        %839 = vmatprep.subr.mxu0 0.0
        %840 = vmatpush1.xpose.msra.mxu0 %v802
        %841 = vmatprep.subr.mxu0 0.0
        %842 = vmatpush1.xpose.msra.mxu0 %v799
        %843 = vmatprep.subr.mxu0 0.0
        %844 = vmatpush1.xpose.msra.mxu0 %v796
        %845 = vmatprep.subr.mxu0 0.0
        %846 = vmatpush1.xpose.msra.mxu0 %v793
        %847 = vmatprep.subr.mxu0 0.0
        %848 = vmatpush1.xpose.msra.mxu0 %v790
        %849 = vmatprep.subr.mxu0 0.0
        %850 = vmatpush1.xpose.msra.mxu0 %v787
        %851 = vmatprep.subr.mxu0 0.0
        %852 = vmatpush1.xpose.msra.mxu0 %v784
        %853 = vmatprep.subr.mxu0 0.0
        %854 = vmatpush1.xpose.msra.mxu0 %v781
        %855 = vmatprep.subr.mxu0 0.0
        %856 = vmatpush1.xpose.msra.mxu0 %v778
        %857 = vmatprep.subr.mxu0 0.0
        %858 = vmatpush2.xpose.msra.mxu0 0.0
        %859 = vmatprep.subr.mxu0 0.0
        %860 = vmatpush2.xpose.msra.mxu0 0.0
        %861 = vmatprep.subr.mxu0 0.0
        %862 = vmatpush2.xpose.msra.mxu0 0.0
        %863 = vmatprep.subr.mxu0 0.0
        %864 = vmatpush2.xpose.msra.mxu0 0.0
        %865 = vmatprep.subr.mxu0 0.0
        %866 = vmatpush2.xpose.msra.mxu0 0.0
        %867 = vmatprep.subr.mxu0 0.0
        %868 = vmatpush2.xpose.msra.mxu0 0.0
        %869 = vmatprep.subr.mxu0 0.0
        %870 = vmatpush2.xpose.msra.mxu0 0.0
        %871 = vmatprep.subr.mxu0 0.0
        %872 = vmatpush2.xpose.msra.mxu0 0.0
        %873 = vmatprep.subr.mxu0 0.0
        %874 = vmatpush2.xpose.msra.mxu0 0.0
        %875 = vmatprep.subr.mxu0 0.0
        %876 = vmatpush2.xpose.msra.mxu0 0.0
        %877 = vmatprep.subr.mxu0 0.0
        %878 = vmatpush2.xpose.msra.mxu0 0.0
        %879 = vmatprep.subr.mxu0 0.0
        %880 = vmatpush2.xpose.msra.mxu0 0.0
        %881 = vmatprep.subr.mxu0 0.0
        %882 = vmatpush2.xpose.msra.mxu0 0.0
        %883 = vmatprep.subr.mxu0 0.0
        %884 = vmatpush2.xpose.msra.mxu0 0.0
        %885 = vmatprep.subr.mxu0 0.0
        %886 = vmatpush2.xpose.msra.mxu0 0.0
        %887 = vmatprep.subr.mxu0 0.0
        %888 = vmatpush2.xpose.msra.mxu0 0.0
        %889 = vmatprep.mubr.f32.mxu0 0.0
        %890 = vmatmul.mubr.f32.gmra.mxu0 %v766
        %v891 = vpop.f32.mrf.mxu0
        %v892 = vadd.f32 %v747, %v891
        %v893 = vpop.f32.mrf.mxu0
        %894 = vmatprep.mubr.f32.mxu0 0.0
        %895 = vmatmul.mubr.f32.gmra.mxu0 %v769
        %v896 = vpop.f32.mrf.mxu0
        %v897 = vadd.f32 %v752, %v896
        %v898 = vpop.f32.mrf.mxu0
        %899 = vmatprep.mubr.f32.mxu0 0.0
        %900 = vmatmul.mubr.f32.gmra.mxu0 %v772
        %v901 = vpop.f32.mrf.mxu0
        %v902 = vadd.f32 %v757, %v901
        %v903 = vpop.f32.mrf.mxu0
        %904 = vmatprep.mubr.f32.mxu0 0.0
        %905 = vmatmul.mubr.f32.gmra.mxu0 %v775
        %v906 = vpop.f32.mrf.mxu0
        %v907 = vadd.f32 %v762, %v906
        %v908 = vpop.f32.mrf.mxu0
        %909 = vdwg.mxu0
        %v910 = vld [vmem:[%s6] sm:$0xff]
        %v911 = vld [vmem:[%s6 + $0x8] sm:$0xff]
        %v912 = vld [vmem:[%s6 + $0x10] sm:$0xff]
        %v913 = vld [vmem:[%s6 + $0x18] sm:$0xff]
        %915 = vset.pattern.permute.xlu0 0
        %916 = vperm.xlu0 %915, %v910
        %v917 = vpop.permute.xlu0 %916
        %920 = vset.pattern.permute.xlu0 0
        %921 = vperm.xlu0 %920, %v911
        %v922 = vpop.permute.xlu0 %921
        %925 = vset.pattern.permute.xlu0 0
        %926 = vperm.xlu0 %925, %v912
        %v927 = vpop.permute.xlu0 %926
        %930 = vset.pattern.permute.xlu0 0
        %931 = vperm.xlu0 %930, %v913
        %v932 = vpop.permute.xlu0 %931
        %v934 = vadd.f32 %v892, %v917
        %v935 = vadd.f32 %v897, %v922
        %v936 = vadd.f32 %v902, %v927
        %v937 = vadd.f32 %v907, %v932
        %v938 = vmax.f32 %v934, 0.0
        %v939 = vmax.f32 %v935, 0.0
        %v940 = vmax.f32 %v936, 0.0
        %v941 = vmax.f32 %v937, 0.0
        %v942 = vld [vmem:[%s7] sm:$0xff]
        %v943 = vld [vmem:[%s7 + $0x8] sm:$0xff]
        %v944 = vld [vmem:[%s7 + $0x10] sm:$0xff]
        %v945 = vld [vmem:[%s7 + $0x18] sm:$0xff]
        %v946 = vld [vmem:[%s8] sm:$0xff]
        %v947 = vld [vmem:[%s8 + $0x8] sm:$0xff]
        %v948 = vld [vmem:[%s8 + $0x10] sm:$0xff]
        %v949 = vld [vmem:[%s8 + $0x18] sm:$0xff]
        %951 = vset.pattern.permute.xlu0 0
        %952 = vperm.xlu0 %951, %v946
        %v953 = vpop.permute.xlu0 %952
        %956 = vset.pattern.permute.xlu0 0
        %957 = vperm.xlu0 %956, %v947
        %v958 = vpop.permute.xlu0 %957
        %961 = vset.pattern.permute.xlu0 0
        %962 = vperm.xlu0 %961, %v948
        %v963 = vpop.permute.xlu0 %962
        %966 = vset.pattern.permute.xlu0 0
        %967 = vperm.xlu0 %966, %v949
        %v968 = vpop.permute.xlu0 %967
        %v971 = vsel %vm667, %v942, 0
        %v974 = vsel %vm667, %v943, 0
        %v977 = vsel %vm667, %v944, 0
        %v980 = vsel %vm667, %v945, 0
        %982 = vmatprep.subr.mxu0 0.0
        %983 = vmatpush1.msra.mxu0 0.0
        %984 = vmatprep.subr.mxu0 0.0
        %985 = vmatpush1.msra.mxu0 0.0
        %986 = vmatprep.subr.mxu0 0.0
        %987 = vmatpush1.msra.mxu0 0.0
        %988 = vmatprep.subr.mxu0 0.0
        %989 = vmatpush1.msra.mxu0 0.0
        %990 = vmatprep.subr.mxu0 0.0
        %991 = vmatpush1.msra.mxu0 0.0
        %992 = vmatprep.subr.mxu0 0.0
        %993 = vmatpush1.msra.mxu0 0.0
        %994 = vmatprep.subr.mxu0 0.0
        %995 = vmatpush1.msra.mxu0 0.0
        %996 = vmatprep.subr.mxu0 0.0
        %997 = vmatpush1.msra.mxu0 0.0
        %998 = vmatprep.subr.mxu0 0.0
        %999 = vmatpush1.msra.mxu0 0.0
        %1000 = vmatprep.subr.mxu0 0.0
        %1001 = vmatpush1.msra.mxu0 0.0
        %1002 = vmatprep.subr.mxu0 0.0
        %1003 = vmatpush1.msra.mxu0 0.0
        %1004 = vmatprep.subr.mxu0 0.0
        %1005 = vmatpush1.msra.mxu0 0.0
        %1006 = vmatprep.subr.mxu0 0.0
        %1007 = vmatpush1.msra.mxu0 %v941
        %1008 = vmatprep.subr.mxu0 0.0
        %1009 = vmatpush1.msra.mxu0 %v940
        %1010 = vmatprep.subr.mxu0 0.0
        %1011 = vmatpush1.msra.mxu0 %v939
        %1012 = vmatprep.subr.mxu0 0.0
        %1013 = vmatpush1.msra.mxu0 %v938
        %1014 = vmatprep.subr.mxu0 0.0
        %1015 = vmatpush2.msra.mxu0 0.0
        %1016 = vmatprep.subr.mxu0 0.0
        %1017 = vmatpush2.msra.mxu0 0.0
        %1018 = vmatprep.subr.mxu0 0.0
        %1019 = vmatpush2.msra.mxu0 0.0
        %1020 = vmatprep.subr.mxu0 0.0
        %1021 = vmatpush2.msra.mxu0 0.0
        %1022 = vmatprep.subr.mxu0 0.0
        %1023 = vmatpush2.msra.mxu0 0.0
        %1024 = vmatprep.subr.mxu0 0.0
        %1025 = vmatpush2.msra.mxu0 0.0
        %1026 = vmatprep.subr.mxu0 0.0
        %1027 = vmatpush2.msra.mxu0 0.0
        %1028 = vmatprep.subr.mxu0 0.0
        %1029 = vmatpush2.msra.mxu0 0.0
        %1030 = vmatprep.subr.mxu0 0.0
        %1031 = vmatpush2.msra.mxu0 0.0
        %1032 = vmatprep.subr.mxu0 0.0
        %1033 = vmatpush2.msra.mxu0 0.0
        %1034 = vmatprep.subr.mxu0 0.0
        %1035 = vmatpush2.msra.mxu0 0.0
        %1036 = vmatprep.subr.mxu0 0.0
        %1037 = vmatpush2.msra.mxu0 0.0
        %1038 = vmatprep.subr.mxu0 0.0
        %1039 = vmatpush2.msra.mxu0 0.0
        %1040 = vmatprep.subr.mxu0 0.0
        %1041 = vmatpush2.msra.mxu0 0.0
        %1042 = vmatprep.subr.mxu0 0.0
        %1043 = vmatpush2.msra.mxu0 0.0
        %1044 = vmatprep.subr.mxu0 0.0
        %1045 = vmatpush2.msra.mxu0 0.0
        %1046 = vmatprep.mubr.f32.mxu0 0.0
        %1047 = vmatmul.mubr.f32.gmra.mxu0 %v971
        %v1048 = vpop.f32.mrf.mxu0
        %v1049 = vadd.f32 %v953, %v1048
        %v1050 = vpop.f32.mrf.mxu0
        %1051 = vmatprep.mubr.f32.mxu0 0.0
        %1052 = vmatmul.mubr.f32.gmra.mxu0 %v974
        %v1053 = vpop.f32.mrf.mxu0
        %v1054 = vadd.f32 %v958, %v1053
        %v1055 = vpop.f32.mrf.mxu0
        %1056 = vmatprep.mubr.f32.mxu0 0.0
        %1057 = vmatmul.mubr.f32.gmra.mxu0 %v977
        %v1058 = vpop.f32.mrf.mxu0
        %v1059 = vadd.f32 %v963, %v1058
        %v1060 = vpop.f32.mrf.mxu0
        %1061 = vmatprep.mubr.f32.mxu0 0.0
        %1062 = vmatmul.mubr.f32.gmra.mxu0 %v980
        %v1063 = vpop.f32.mrf.mxu0
        %v1064 = vadd.f32 %v968, %v1063
        %v1065 = vpop.f32.mrf.mxu0
        %1066 = vdwg.mxu0
        %v1067 = vmax.f32 %v1049, 0.0
        %v1068 = vmax.f32 %v1054, 0.0
        %v1069 = vmax.f32 %v1059, 0.0
        %v1070 = vmax.f32 %v1064, 0.0
        %v1071 = vld [vmem:[%s9] sm:$0x3]
        %v1072 = vld [vmem:[%s10] sm:$0x3]
        %1074 = vset.pattern.permute.xlu0 0
        %1075 = vperm.xlu0 %1074, %v1072
        %v1076 = vpop.permute.xlu0 %1075
        %v1079 = vsel %vm667, %v1071, 0
        %1081 = vmatprep.subr.mxu0 0.0
        %1082 = vmatpush1.msra.mxu0 0.0
        %1083 = vmatprep.subr.mxu0 0.0
        %1084 = vmatpush1.msra.mxu0 0.0
        %1085 = vmatprep.subr.mxu0 0.0
        %1086 = vmatpush1.msra.mxu0 0.0
        %1087 = vmatprep.subr.mxu0 0.0
        %1088 = vmatpush1.msra.mxu0 0.0
        %1089 = vmatprep.subr.mxu0 0.0
        %1090 = vmatpush1.msra.mxu0 0.0
        %1091 = vmatprep.subr.mxu0 0.0
        %1092 = vmatpush1.msra.mxu0 0.0
        %1093 = vmatprep.subr.mxu0 0.0
        %1094 = vmatpush1.msra.mxu0 0.0
        %1095 = vmatprep.subr.mxu0 0.0
        %1096 = vmatpush1.msra.mxu0 0.0
        %1097 = vmatprep.subr.mxu0 0.0
        %1098 = vmatpush1.msra.mxu0 0.0
        %1099 = vmatprep.subr.mxu0 0.0
        %1100 = vmatpush1.msra.mxu0 0.0
        %1101 = vmatprep.subr.mxu0 0.0
        %1102 = vmatpush1.msra.mxu0 0.0
        %1103 = vmatprep.subr.mxu0 0.0
        %1104 = vmatpush1.msra.mxu0 0.0
        %1105 = vmatprep.subr.mxu0 0.0
        %1106 = vmatpush1.msra.mxu0 %v1070
        %1107 = vmatprep.subr.mxu0 0.0
        %1108 = vmatpush1.msra.mxu0 %v1069
        %1109 = vmatprep.subr.mxu0 0.0
        %1110 = vmatpush1.msra.mxu0 %v1068
        %1111 = vmatprep.subr.mxu0 0.0
        %1112 = vmatpush1.msra.mxu0 %v1067
        %1113 = vmatprep.subr.mxu0 0.0
        %1114 = vmatpush2.msra.mxu0 0.0
        %1115 = vmatprep.subr.mxu0 0.0
        %1116 = vmatpush2.msra.mxu0 0.0
        %1117 = vmatprep.subr.mxu0 0.0
        %1118 = vmatpush2.msra.mxu0 0.0
        %1119 = vmatprep.subr.mxu0 0.0
        %1120 = vmatpush2.msra.mxu0 0.0
        %1121 = vmatprep.subr.mxu0 0.0
        %1122 = vmatpush2.msra.mxu0 0.0
        %1123 = vmatprep.subr.mxu0 0.0
        %1124 = vmatpush2.msra.mxu0 0.0
        %1125 = vmatprep.subr.mxu0 0.0
        %1126 = vmatpush2.msra.mxu0 0.0
        %1127 = vmatprep.subr.mxu0 0.0
        %1128 = vmatpush2.msra.mxu0 0.0
        %1129 = vmatprep.subr.mxu0 0.0
        %1130 = vmatpush2.msra.mxu0 0.0
        %1131 = vmatprep.subr.mxu0 0.0
        %1132 = vmatpush2.msra.mxu0 0.0
        %1133 = vmatprep.subr.mxu0 0.0
        %1134 = vmatpush2.msra.mxu0 0.0
        %1135 = vmatprep.subr.mxu0 0.0
        %1136 = vmatpush2.msra.mxu0 0.0
        %1137 = vmatprep.subr.mxu0 0.0
        %1138 = vmatpush2.msra.mxu0 0.0
        %1139 = vmatprep.subr.mxu0 0.0
        %1140 = vmatpush2.msra.mxu0 0.0
        %1141 = vmatprep.subr.mxu0 0.0
        %1142 = vmatpush2.msra.mxu0 0.0
        %1143 = vmatprep.subr.mxu0 0.0
        %1144 = vmatpush2.msra.mxu0 0.0
        %1145 = vmatprep.mubr.f32.mxu0 0.0
        %1146 = vmatmul.mubr.f32.gmra.mxu0 %v1079
        %v1147 = vpop.f32.mrf.mxu0
        %v1148 = vadd.f32 %v1076, %v1147
        %v1149 = vpop.f32.mrf.mxu0
        %1150 = vdwg.mxu0
        %1151 = vst [vmem:[%s420] sm:$0x3] %v1148
        %s1152 = sand.u32 %s274, 1
        %s1153 = scalar_lea.sflag [#allocation3], %s1152
        %s1154 = sand.u32 %s274, 1
        %s1155 = smul.addr %s1154, 2
        %s1156 = scalar_lea.vmem [#allocation2], %s1155
        // Predicated region
        $region65: #{tpu_custom_call.1} parent=63 // pred_check
          %p1157 = pneg %p284
        $region66: #{tpu_custom_call.1} parent=63 // pred_check_branch
          %1159 = sbr.rel (%p1157) target = $region68
        $region67: #{tpu_custom_call.1} parent=63 // pred_region
          %s1161 = ssub.s32 32, 32
          %1162 = vsyncadd %s1153, %s1161
          %s1163 = smul.addr %s25, 32
          %s1164 = scalar_lea.hbm %s11, %s1163
          %s1166 = sshll.u32 %s1156, 4
          %s1167 = int_to_ptr.vmem [resolvable:$true] %s1166
          %1169 = dma.vmem_to_hbm [thread:$0]  %s1167, 32, %s1164, %s1153
        $region68: #{tpu_custom_call.1} parent=63 // pred_fallthru
          _
      $region64: #{tpu_custom_call.1} parent=5 // pred_fallthru
        _
      %p1170 = scmp.le.s32.totalorder 2, %s20
      // Predicated region
      $region69: #{tpu_custom_call.1} parent=5 // pred_check
        %p1171 = pneg %p1170
      $region70: #{tpu_custom_call.1} parent=5 // pred_check_branch
        %1173 = sbr.rel (%p1171) target = $region72
      $region71: #{tpu_custom_call.1} parent=5 // pred_region
        %s1174 = ssub.s32 %s20, 2
        // Predicated region
        $region73: #{tpu_custom_call.1} parent=71 // pred_check
          %p1175 = pneg %p290
        $region74: #{tpu_custom_call.1} parent=71 // pred_check_branch
          %1177 = sbr.rel (%p1175) target = $region76
        $region75: #{tpu_custom_call.1} parent=71 // pred_region
          %s1178 = sand.u32 %s275, 1
          %s1179 = scalar_lea.sflag [#allocation3], %s1178
          %s1180 = sand.u32 %s275, 1
          %s1181 = smul.addr %s1180, 2
          %s1182 = scalar_lea.vmem [#allocation2], %s1181
          %1183 = dma.done %s1179, 32
        $region76: #{tpu_custom_call.1} parent=71 // pred_fallthru
          _
      $region72: #{tpu_custom_call.1} parent=5 // pred_fallthru
        _
    $region6: #{tpu_custom_call.1} parent=1 // loop_footer
      %s24 = sadd.s32 1, %s20
    $region7: #{tpu_custom_call.1} parent=1 // loop_footer_branch
      %19 = sbr.rel target = $region3
    $region8: #{tpu_custom_call.1} parent=1 // loop_exit
      _
    %1184 = vsyncpa [#allocation3], 1
    %s1185 = scalar_lea.sflag [#allocation3], 1
    %1186 = vsyncpa %s1185, 1

</llo_original>
